<compile_context>
chip_gen: v7x
topology: tpu7x:2x2x1
jax: 0.10.0
libtpu: 0.0.40
codegen_flags: <defaults>
</compile_context>

<pallas_src>
import jax
import jax.numpy as jnp
from jax.experimental import pallas as pl
from jax.experimental.pallas import tpu as pltpu


def attn_kernel(h_ref, s_ref, wb_ref, out_ref):
    """h: (tB, S, H), s: (tB, H), wb: (2H+1, H) = [combine.weight.T ; bias]."""
    H = out_ref.shape[-1]
    h = h_ref[...]                                   # (tB, S, H)
    s = s_ref[...]                                   # (tB, H)

    # Degenerate softmax (dim of size 1) => attention weights are all 1.0,
    # so context is just the sum over the sequence axis (sublane reduce).
    context = jnp.sum(h, axis=1)                     # (tB, H)

    # combine(cat([s, context], dim=-1)): one fused MXU dot against the
    # pre-transposed weight rows, bias packed as the last (sublane-aligned,
    # since 2H is a multiple of 8 here) row of the same array.
    lhs = jnp.concatenate([s, context], axis=1)      # (tB, 2H)
    out = jnp.dot(lhs, wb_ref[: 2 * H, :], preferred_element_type=jnp.float32)
    out = out + wb_ref[2 * H :, :]                   # (1, H) bias, broadcast add

    out_ref[...] = out.astype(out_ref.dtype)


def prepare_params(params):
    """One-time weight layout prep (hoisted out of the per-call forward path)."""
    H = params["C_b"].shape[0]
    cwt = jnp.asarray(params["C_w"], jnp.float32).T          # (2H, H)
    cb = jnp.asarray(params["C_b"], jnp.float32).reshape(1, H)
    return {"wb": jnp.concatenate([cwt, cb], axis=0)}        # (2H+1, H)


def attn_forward_batched(h, s, prepared, block_b=8):
    """B decode steps in one pallas_call.

    h: (B, S, H) encoder outputs per step, s: (B, H) decoder states.
    Returns (B, H).
    """
    B, S, H = h.shape
    tB = min(block_b, B)
    Bp = ((B + tB - 1) // tB) * tB
    if Bp != B:                                      # pad to a whole number of batch tiles
        h = jnp.pad(h, ((0, Bp - B), (0, 0), (0, 0)))
        s = jnp.pad(s, ((0, Bp - B), (0, 0)))

    out = pl.pallas_call(
        attn_kernel,
        out_shape=jax.ShapeDtypeStruct((Bp, H), h.dtype),
        grid=(Bp // tB,),
        in_specs=[
            pl.BlockSpec((tB, S, H), lambda b: (b, 0, 0)),       # per-tile h
            pl.BlockSpec((tB, H), lambda b: (b, 0)),             # per-tile s
            pl.BlockSpec((2 * H + 1, H), lambda b: (0, 0)),      # weights: fetched once
        ],
        out_specs=pl.BlockSpec((tB, H), lambda b: (b, 0)),
        compiler_params=pltpu.CompilerParams(
            dimension_semantics=("parallel",)),      # shard batch tiles across TCs (v7x)
    )(h, s, prepared["wb"])

    return out[:B] if Bp != B else out


def attn_forward(h, s, prepared):
    """Single decode step with the original module shapes.

    h: (S, 1, H), s: (1, 1, H). Returns (1, 1, H).
    """
    S, _, H = h.shape
    hb = h.reshape(S, H)[None]          # (1, S, H)  (contiguous reshapes: metadata-only)
    sb = s.reshape(1, H)                # (1, H)
    out = attn_forward_batched(hb, sb, prepared, block_b=1)
    return out.reshape(1, 1, H)


def attn_reference(h, s, params):
    """Pure-JAX reference mirroring the PyTorch forward (full score path)."""
    S, _, H = h.shape
    h2d = h.reshape(S, H)
    s1d = s.reshape(H)
    temp_s = s1d @ params["W_w"].T + params["W_b"]                # (A,)
    temp_h = h2d @ params["U_w"].T + params["U_b"]                # (S, A)
    temp = jnp.tanh(temp_h + temp_s[None, :])
    scores = temp @ params["V_w"].T + params["V_b"]               # (S, 1)
    weights = jax.nn.softmax(scores, axis=1)                      # nn.Softmax() implicit dim=1
    context = weights.T @ h2d                                     # (1, H)
    cat = jnp.concatenate([s.reshape(1, H), context], axis=1)     # (1, 2H)
    out = cat @ params["C_w"].T + params["C_b"]                   # (1, H)
    return out.reshape(1, 1, H)


def attn_reference_batched(h_b, s_b, params):
    """Batched pure-JAX reference: h_b (B, S, H), s_b (B, H) -> (B, H)."""
    temp_s = s_b @ params["W_w"].T + params["W_b"]                          # (B, A)
    temp_h = jnp.einsum("bsh,ah->bsa", h_b, params["U_w"]) + params["U_b"]  # (B, S, A)
    temp = jnp.tanh(temp_h + temp_s[:, None, :])
    scores = jnp.einsum("bsa,oa->bso", temp, params["V_w"]) + params["V_b"] # (B, S, 1)
    weights = jax.nn.softmax(scores, axis=-1)                               # size-1 dim
    context = jnp.einsum("bso,bsh->bh", weights, h_b)                       # (B, H)
    cat = jnp.concatenate([s_b, context], axis=1)                           # (B, 2H)
    return cat @ params["C_w"].T + params["C_b"]                            # (B, H)


def init_params(key, hidden_size, attn_size):
    """Deterministic init, PyTorch nn.Linear-style uniform(-1/sqrt(fan_in), +)."""
    ks = jax.random.split(key, 8)

    def lin(kw, kb, out_f, in_f):
        bound = 1.0 / jnp.sqrt(in_f)
        w = jax.random.uniform(kw, (out_f, in_f), jnp.float32, -bound, bound)
        b = jax.random.uniform(kb, (out_f,), jnp.float32, -bound, bound)
        return w, b

    U_w, U_b = lin(ks[0], ks[1], attn_size, hidden_size)
    W_w, W_b = lin(ks[2], ks[3], attn_size, hidden_size)
    V_w, V_b = lin(ks[4], ks[5], 1, attn_size)
    C_w, C_b = lin(ks[6], ks[7], hidden_size, 2 * hidden_size)
    return dict(U_w=U_w, U_b=U_b, W_w=W_w, W_b=W_b,
                V_w=V_w, V_b=V_b, C_w=C_w, C_b=C_b)


if __name__ == "__main__":
    SEQ, HIDDEN, ATTN = 8, 32, 128
    BATCH = 16          # batched decode steps amortize launch/DMA overhead

    key = jax.random.PRNGKey(0)
    k_h, k_s, k_p = jax.random.split(key, 3)

    params = init_params(k_p, HIDDEN, ATTN)
    prepared = prepare_params(params)          # one-time weight layout (hoisted)

    # --- single step, exact module shapes: h (S,1,H), s (1,1,H) -> (1,1,H) ---
    h1 = jax.random.normal(k_h, (SEQ, 1, HIDDEN), jnp.float32)
    s1 = jax.random.normal(k_s, (1, 1, HIDDEN), jnp.float32)
    out1 = jax.block_until_ready(attn_forward(h1, s1, prepared))
    ref1 = attn_reference(h1, s1, params)
    assert out1.shape == (1, 1, HIDDEN)
    assert jnp.allclose(out1, ref1, atol=1e-4, rtol=1e-4), "single-step mismatch"

    # --- batched: BATCH decode steps in one pallas_call, grid=(BATCH/8,) ---
    hb = jax.random.normal(k_h, (BATCH, SEQ, HIDDEN), jnp.float32)
    sb = jax.random.normal(k_s, (BATCH, HIDDEN), jnp.float32)
    outb = jax.block_until_ready(attn_forward_batched(hb, sb, prepared, block_b=8))
    refb = attn_reference_batched(hb, sb, params)
    assert outb.shape == (BATCH, HIDDEN)
    assert jnp.allclose(outb, refb, atol=1e-4, rtol=1e-4), "batched mismatch"

    print("KERNEL_OK")
</pallas_src>

<mosaic_0001>
module attributes {stable_mosaic.version = 11 : i64} {
  func.func @attn_kernel(%arg0: i32, %arg1: memref<1x8x32xf32, #tpu.memory_space<vmem>>, %arg2: memref<1x32xf32, #tpu.memory_space<vmem>>, %arg3: memref<65x32xf32, #tpu.memory_space<vmem>>, %arg4: memref<1x32xf32, #tpu.memory_space<vmem>>) attributes {dimension_semantics = [#tpu.dimension_semantics<parallel>], iteration_bounds = array<i64: 1>, scalar_prefetch = 0 : i64, scratch_operands = 0 : i64, tpu.core_type = #tpu.core_type<tc>, window_params = [{transform_indices = @transform_0, window_bounds = array<i64: 1, 8, 32>}, {transform_indices = @transform_1, window_bounds = array<i64: 1, 32>}, {pipeline_mode = #tpu.pipeline_mode<synchronous>, transform_indices = @transform_2, window_bounds = array<i64: 65, 32>}, {transform_indices = @transform_3, window_bounds = array<i64: 1, 32>}]} {
    %c0 = arith.constant 0 : index
    %c0_0 = arith.constant 0 : index
    %c0_1 = arith.constant 0 : index
    %0 = vector.load %arg1[%c0, %c0_0, %c0_1] : memref<1x8x32xf32, #tpu.memory_space<vmem>>, vector<1x8x32xf32>
    %c0_2 = arith.constant 0 : index
    %c0_3 = arith.constant 0 : index
    %1 = vector.load %arg2[%c0_2, %c0_3] : memref<1x32xf32, #tpu.memory_space<vmem>>, vector<1x32xf32>
    %cst = arith.constant dense<0.000000e+00> : vector<1x32xf32>
    %2 = vector.multi_reduction <add>, %0, %cst [1] : vector<1x8x32xf32> to vector<1x32xf32>
    %3 = tpu.concatenate %1, %2 in 1 : vector<1x32xf32>, vector<1x32xf32> -> vector<1x64xf32>
    %c0_4 = arith.constant 0 : index
    %c0_5 = arith.constant 0 : index
    %4 = vector.load %arg3[%c0_4, %c0_5] : memref<65x32xf32, #tpu.memory_space<vmem>>, vector<64x32xf32>
    %cst_6 = arith.constant dense<0.000000e+00> : vector<1x32xf32>
    %5 = tpu.matmul %3, %4, %cst_6 {dimension_numbers = #tpu.dot_dimension_numbers<[1], [0], [0], [1], [0, 0, 1, 1], [], []>} : vector<1x64xf32>, vector<64x32xf32>, vector<1x32xf32> -> vector<1x32xf32>
    %c64 = arith.constant 64 : index
    %c0_7 = arith.constant 0 : index
    %6 = vector.load %arg3[%c64, %c0_7] : memref<65x32xf32, #tpu.memory_space<vmem>>, vector<1x32xf32>
    %7 = arith.addf %5, %6 : vector<1x32xf32>
    %c0_8 = arith.constant 0 : index
    %c0_9 = arith.constant 0 : index
    %8 = vector.load %arg4[%c0_8, %c0_9] : memref<1x32xf32, #tpu.memory_space<vmem>>, vector<1x32xf32>
    tpu.vector_store %arg4[%c0_8, %c0_9], %7 {strides = array<i32>} : memref<1x32xf32, #tpu.memory_space<vmem>>, vector<1x32xf32>,
    return
  }
  func.func @transform_0(%arg0: i32) -> (i32, i32, i32) {
    %c0_i32 = arith.constant 0 : i32
    %c0_i32_0 = arith.constant 0 : i32
    %c0_i32_1 = arith.constant 0 : i32
    return %arg0, %c0_i32, %c0_i32_0 : i32, i32, i32
  }
  func.func @transform_1(%arg0: i32) -> (i32, i32) {
    %c0_i32 = arith.constant 0 : i32
    %c0_i32_0 = arith.constant 0 : i32
    return %arg0, %c0_i32 : i32, i32
  }
  func.func @transform_2(%arg0: i32) -> (i32, i32) {
    %c0_i32 = arith.constant 0 : i32
    %c0_i32_0 = arith.constant 0 : i32
    %c0_i32_1 = arith.constant 0 : i32
    return %c0_i32, %c0_i32_0 : i32, i32
  }
  func.func @transform_3(%arg0: i32) -> (i32, i32) {
    %c0_i32 = arith.constant 0 : i32
    %c0_i32_0 = arith.constant 0 : i32
    return %arg0, %c0_i32 : i32, i32
  }
}

</mosaic_0001>

<llo_original>
// kernel: tpu_custom_call.1
$region0: #{tpu_custom_call.1}
  #allocation0 [shape = 'u32[]', space=smem, size = 0x4, offset = 0x4, fixed_abs, tag = 'smem constant byte address 0x4 - core index']
  #allocation1 [shape = 'u32[144,128]{1,0:T(1,128)}', space=vmem, size = 0x12000, scoped, tag = 'internal scratch']
  %s0 = inlined_call_operand.vmem [shape: f32[1,8,32], index: 0, kind: input, shape index: {}]
  %s1 = inlined_call_operand.vmem [shape: f32[1,32], index: 1, kind: input, shape index: {}]
  %s2 = inlined_call_operand.vmem [shape: f32[65,32], index: 2, kind: input, shape index: {}]
  %s3 = inlined_call_operand.hbm [shape: f32[1,32], index: 3, kind: output, shape index: {}]
  %s4 = sld [smem:[#allocation0]]
  $region22: #{tpu_custom_call.1} parent=0
    _
  %s6 = ssub.s32 1, %s4
  %s7 = scalar_select 0, %s6, %s4
  $region1: #{tpu_custom_call.1} parent=0
    #allocation2 [shape = 'u8[512]{0}', space=vmem, size = 0x400, scoped, tag = 'output window, operand 0, single buffered']
    #allocation3 [shape = 's32[1]{0}', space=sflag, size = 0x4, scoped, tag = 'scoped memory for tpu_custom_call.1']
    %8 = vsyncpa [#allocation3], 0
    // Predicated region
    $region2: #{tpu_custom_call.1} parent=1 // pred_check
      _
    $region3: #{tpu_custom_call.1} parent=1 // pred_check_branch
      %10 = sbr.rel (0) target = $region5
    $region4: #{tpu_custom_call.1} parent=1 // pred_region
      _
    $region5: #{tpu_custom_call.1} parent=1 // pred_fallthru
      _
    // Predicated region
    $region6: #{tpu_custom_call.1} parent=1 // pred_check
      _
    $region7: #{tpu_custom_call.1} parent=1 // pred_check_branch
      %12 = sbr.rel (0) target = $region9
    $region8: #{tpu_custom_call.1} parent=1 // pred_region
      _
    $region9: #{tpu_custom_call.1} parent=1 // pred_fallthru
      _
    // Predicated region
    $region10: #{tpu_custom_call.1} parent=1 // pred_check
      _
    $region11: #{tpu_custom_call.1} parent=1 // pred_check_branch
      %14 = sbr.rel (0) target = $region13
    $region12: #{tpu_custom_call.1} parent=1 // pred_region
      _
    $region13: #{tpu_custom_call.1} parent=1 // pred_fallthru
      _
    %v15 = vld [vmem:[%s0] sm:$0xff]
    %v16 = vld [vmem:[%s1] sm:$0x1]
    %vm17 = vcmask 261120
    %v18 = vsel %vm17, %v15, 0.0
    %v19 = vrot.slane %v18, 4
    %v20 = vadd.f32 %v18, %v19
    %v21 = vrot.slane %v20, 2
    %v22 = vadd.f32 %v20, %v21
    %v23 = vrot.slane %v22, 1
    %v24 = vadd.f32 %v22, %v23
    %26 = vrot.lane.b32.xlu0 %v24, 32
    %v27 = vpop.permute.xlu0 %26
    %v29 = vsel %vm17, %v16, %v27
    %v30 = vld [vmem:[%s2] sm:$0xff]
    %v31 = vld [vmem:[%s2 + $0x8] sm:$0xff]
    %v32 = vld [vmem:[%s2 + $0x10] sm:$0xff]
    %v33 = vld [vmem:[%s2 + $0x18] sm:$0xff]
    %v34 = vld [vmem:[%s2 + $0x20] sm:$0xff]
    %v35 = vld [vmem:[%s2 + $0x28] sm:$0xff]
    %v36 = vld [vmem:[%s2 + $0x30] sm:$0xff]
    %v37 = vld [vmem:[%s2 + $0x38] sm:$0xff]
    %v38 = vld [vmem:[%s2 + $0x40] sm:$0x1]
    %vm39 = vcmask 523264
    %v41 = vsel %vm39, %v29, 0
    %43 = vmatprep.subr.mxu0 0.0
    %44 = vmatpush1.msra.mxu0 %v30
    %45 = vmatprep.subr.mxu0 0.0
    %46 = vmatpush1.msra.mxu0 %v31
    %47 = vmatprep.subr.mxu0 0.0
    %48 = vmatpush1.msra.mxu0 %v32
    %49 = vmatprep.subr.mxu0 0.0
    %50 = vmatpush1.msra.mxu0 %v33
    %51 = vmatprep.subr.mxu0 0.0
    %52 = vmatpush1.msra.mxu0 %v34
    %53 = vmatprep.subr.mxu0 0.0
    %54 = vmatpush1.msra.mxu0 %v35
    %55 = vmatprep.subr.mxu0 0.0
    %56 = vmatpush1.msra.mxu0 %v36
    %57 = vmatprep.subr.mxu0 0.0
    %58 = vmatpush1.msra.mxu0 %v37
    %59 = vmatprep.subr.mxu0 0.0
    %60 = vmatpush1.msra.mxu0 0.0
    %61 = vmatprep.subr.mxu0 0.0
    %62 = vmatpush1.msra.mxu0 0.0
    %63 = vmatprep.subr.mxu0 0.0
    %64 = vmatpush1.msra.mxu0 0.0
    %65 = vmatprep.subr.mxu0 0.0
    %66 = vmatpush1.msra.mxu0 0.0
    %67 = vmatprep.subr.mxu0 0.0
    %68 = vmatpush1.msra.mxu0 0.0
    %69 = vmatprep.subr.mxu0 0.0
    %70 = vmatpush1.msra.mxu0 0.0
    %71 = vmatprep.subr.mxu0 0.0
    %72 = vmatpush1.msra.mxu0 0.0
    %73 = vmatprep.subr.mxu0 0.0
    %74 = vmatpush1.msra.mxu0 0.0
    %75 = vmatprep.subr.mxu0 0.0
    %76 = vmatpush1.msra.mxu0 0.0
    %77 = vmatprep.subr.mxu0 0.0
    %78 = vmatpush1.msra.mxu0 0.0
    %79 = vmatprep.subr.mxu0 0.0
    %80 = vmatpush1.msra.mxu0 0.0
    %81 = vmatprep.subr.mxu0 0.0
    %82 = vmatpush1.msra.mxu0 0.0
    %83 = vmatprep.subr.mxu0 0.0
    %84 = vmatpush1.msra.mxu0 0.0
    %85 = vmatprep.subr.mxu0 0.0
    %86 = vmatpush1.msra.mxu0 0.0
    %87 = vmatprep.subr.mxu0 0.0
    %88 = vmatpush1.msra.mxu0 0.0
    %89 = vmatprep.subr.mxu0 0.0
    %90 = vmatpush1.msra.mxu0 0.0
    %91 = vmatprep.subr.mxu0 0.0
    %92 = vmatpush1.msra.mxu0 0.0
    %93 = vmatprep.subr.mxu0 0.0
    %94 = vmatpush1.msra.mxu0 0.0
    %95 = vmatprep.subr.mxu0 0.0
    %96 = vmatpush1.msra.mxu0 0.0
    %97 = vmatprep.subr.mxu0 0.0
    %98 = vmatpush1.msra.mxu0 0.0
    %99 = vmatprep.subr.mxu0 0.0
    %100 = vmatpush1.msra.mxu0 0.0
    %101 = vmatprep.subr.mxu0 0.0
    %102 = vmatpush1.msra.mxu0 0.0
    %103 = vmatprep.subr.mxu0 0.0
    %104 = vmatpush1.msra.mxu0 0.0
    %105 = vmatprep.subr.mxu0 0.0
    %106 = vmatpush1.msra.mxu0 0.0
    %107 = vmatprep.mubr.f32.mxu0 0.0
    %108 = vmatmul.mubr.f32.gmra.mrb[0].mxu0 %v41
    %v109 = vpop.f32.mrb[0].mxu0
    %v110 = vadd.f32 %v38, %v109
    %v111 = vpop.f32.mrb[0].mxu0
    %112 = vdwg.mxu0
    %vm113 = vcmask 253952
    %114 = vst.msk [vmem:[#allocation2] sm:$0x1] %vm113, %v110
    // Predicated region
    $region14: #{tpu_custom_call.1} parent=1 // pred_check
      _
    $region15: #{tpu_custom_call.1} parent=1 // pred_check_branch
      %116 = sbr.rel (0) target = $region17
    $region16: #{tpu_custom_call.1} parent=1 // pred_region
      %s118 = ssub.s32 16, 16
      %119 = vsyncadd [#allocation3], %s118
      %s121 = sshll.u32 [#allocation2], 4
      %s122 = int_to_ptr.vmem [resolvable:$true] %s121
      %124 = dma.vmem_to_hbm [thread:$0]  %s122, 16, %s3, [#allocation3]
    $region17: #{tpu_custom_call.1} parent=1 // pred_fallthru
      _
    // Predicated region
    $region18: #{tpu_custom_call.1} parent=1 // pred_check
      _
    $region19: #{tpu_custom_call.1} parent=1 // pred_check_branch
      %126 = sbr.rel (0) target = $region21
    $region20: #{tpu_custom_call.1} parent=1 // pred_region
      %127 = dma.done [#allocation3], 16
    $region21: #{tpu_custom_call.1} parent=1 // pred_fallthru
      _
    %128 = vsyncpa [#allocation3], 1

</llo_original>
